<compile_context>
chip_gen: v7x
topology: tpu7x:2x2x1
jax: 0.10.0
libtpu: 0.0.40
codegen_flags: <defaults>
</compile_context>

<pallas_src>
import functools

import jax
import jax.numpy as jnp
from jax.experimental import pallas as pl
from jax.experimental.pallas import tpu as pltpu

LANE = 128            # TPU lane width
GROUP = LANE // 8     # 16 batch rows (8 features each) packed per 128-lane row


def _round_up(a, b):
    return ((a + b - 1) // b) * b


def _sigmoid(z):
    # 1/(1+exp(-z)) == 0.5*tanh(0.5*z)+0.5 : one EUP op + cheap VALU ops.
    return 0.5 * jnp.tanh(0.5 * z) + 0.5


def mlp_kernel(w1_ref, w2_ref, w3_ref, b1_ref, b2_ref, b3_ref, x_ref, o_ref):
    # x_ref : (R, 128)  -- the native (N, 8) buffer viewed as (N/16, 128):
    #                      lane 8j+f of row r holds x[16r+j, f].
    # w*_ref: block-diagonal expanded weights kron(I_16, W^T), so the batch
    #         interleave stays in the lane axis through every layer.
    # o_ref : (R, 16)   -- lane j of row r holds y[16r+j].
    x = x_ref[...]
    z1 = jnp.dot(x, w1_ref[...], preferred_element_type=jnp.float32) + b1_ref[...]
    h1 = _sigmoid(z1)                                 # (R, 96)
    z2 = jnp.dot(h1, w2_ref[...], preferred_element_type=jnp.float32) + b2_ref[...]
    h2 = _sigmoid(z2)                                 # (R, 64)
    z3 = jnp.dot(h2, w3_ref[...], preferred_element_type=jnp.float32) + b3_ref[...]
    o_ref[...] = _sigmoid(z3).astype(o_ref.dtype)     # (R, 16)


def pack_params(w1, b1, w2, b2, w3, b3):
    """Expand PyTorch-layout (out, in) weights into lane-interleaved form.

    W_big = kron(I_16, W^T) is block-diagonal, so
    (x viewed as (N/16, 128)) @ W1_big keeps the 16-way batch interleave in
    the lane axis; biases are tiled to match.  Done once on the host (tiny).
    """
    f32 = jnp.float32
    eye = jnp.eye(GROUP, dtype=f32)
    w1b = jnp.kron(eye, w1.astype(f32).T)             # (128, 96)
    w2b = jnp.kron(eye, w2.astype(f32).T)             # (96, 64)
    w3b = jnp.kron(eye, w3.astype(f32).T)             # (64, 16)
    b1b = jnp.tile(b1.astype(f32), GROUP)[None, :]    # (1, 96)
    b2b = jnp.tile(b2.astype(f32), GROUP)[None, :]    # (1, 64)
    b3b = jnp.tile(b3.astype(f32), GROUP)[None, :]    # (1, 16)
    return (w1b, w2b, w3b, b1b, b2b, b3b)


@functools.partial(jax.jit, static_argnames=("lane_tile",))
def mlp_forward(x, params, *, lane_tile=32768):
    """x: (N, 8) f32 -> (N, 1) f32; same math as the PyTorch Model.forward."""
    w1b, w2b, w3b, b1b, b2b, b3b = params
    assert x.ndim == 2 and x.shape[1] == 8
    assert lane_tile % LANE == 0, "lane_tile must be a multiple of 128"
    x = x.astype(jnp.float32)

    n = x.shape[0]
    n_pad = _round_up(n, GROUP)                 # pads only if N % 16 != 0
    if n_pad != n:
        x = jnp.pad(x, ((0, n_pad - n), (0, 0)))
    rows = n_pad // GROUP
    xr = x.reshape(rows, LANE)                  # contiguous view, no data movement

    r_tile = lane_tile // GROUP                 # rows (of 16 batch elems) per step
    if rows <= r_tile:
        r_tile = rows                           # single step, full (ragged) extent
    grid = (pl.cdiv(rows, r_tile),)             # partial last block allowed

    const = lambda i: (0, 0)
    out = pl.pallas_call(
        mlp_kernel,
        out_shape=jax.ShapeDtypeStruct((rows, 16), jnp.float32),
        grid=grid,
        in_specs=[
            pl.BlockSpec((128, 96), const),                  # VMEM-resident params
            pl.BlockSpec((96, 64), const),
            pl.BlockSpec((64, 16), const),
            pl.BlockSpec((1, 96), const),
            pl.BlockSpec((1, 64), const),
            pl.BlockSpec((1, 16), const),
            pl.BlockSpec((r_tile, LANE), lambda i: (i, 0)),  # x, dense tiles
        ],
        out_specs=pl.BlockSpec((r_tile, 16), lambda i: (i, 0)),
        compiler_params=pltpu.CompilerParams(
            dimension_semantics=("parallel",)),              # megacore on v7x
    )(w1b, w2b, w3b, b1b, b2b, b3b, xr)

    return out.reshape(n_pad, 1)[:n]            # contiguous view + slice


def init_params(key):
    # PyTorch-style uniform(-1/sqrt(fan_in), 1/sqrt(fan_in)); W is (out, in).
    def linear(k, fan_in, fan_out):
        kw, kb = jax.random.split(k)
        bound = float(fan_in) ** -0.5
        w = jax.random.uniform(kw, (fan_out, fan_in), jnp.float32, -bound, bound)
        b = jax.random.uniform(kb, (fan_out,), jnp.float32, -bound, bound)
        return w, b

    k1, k2, k3 = jax.random.split(key, 3)
    return linear(k1, 8, 6), linear(k2, 6, 4), linear(k3, 4, 1)


if __name__ == "__main__":
    key = jax.random.PRNGKey(0)
    kx1, kx2, kx3, kp = jax.random.split(key, 4)

    (w1, b1), (w2, b2), (w3, b3) = init_params(kp)
    params = pack_params(w1, b1, w2, b2, w3, b3)

    def reference(x):
        # Plain-JAX reference, identical math path to the PyTorch forward.
        h1 = jax.nn.sigmoid(x @ w1.T + b1)
        h2 = jax.nn.sigmoid(h1 @ w2.T + b2)
        return jax.nn.sigmoid(h2 @ w3.T + b3)

    # Small batch consistent with the module (8 input features), single step.
    x_small = jax.random.normal(kx1, (32, 8), dtype=jnp.float32)
    y_small = jax.block_until_ready(mlp_forward(x_small, params))
    assert y_small.shape == (32, 1)
    assert jnp.allclose(y_small, reference(x_small), atol=1e-3), "mismatch (small)"

    # Ragged batch: exercises the pad-to-16 fallback and a multi-step grid
    # with a partial last block (lane_tile=256 -> 16 rows of 16 per step).
    x_rag = jax.random.normal(kx2, (1000, 8), dtype=jnp.float32)
    y_rag = jax.block_until_ready(mlp_forward(x_rag, params, lane_tile=256))
    assert y_rag.shape == (1000, 1)
    assert jnp.allclose(y_rag, reference(x_rag), atol=1e-3), "mismatch (ragged)"

    # Larger batch on the default 32768-lane tiles (multi-step grid).
    x_big = jax.random.normal(kx3, (65536, 8), dtype=jnp.float32)
    y_big = jax.block_until_ready(mlp_forward(x_big, params))
    assert y_big.shape == (65536, 1)
    assert jnp.allclose(y_big, reference(x_big), atol=1e-3), "mismatch (big)"

    print("KERNEL_OK")
</pallas_src>

<mosaic_0001>
module attributes {stable_mosaic.version = 11 : i64} {
  func.func @mlp_kernel(%arg0: i32, %arg1: memref<128x96xf32, #tpu.memory_space<vmem>>, %arg2: memref<96x64xf32, #tpu.memory_space<vmem>>, %arg3: memref<64x16xf32, #tpu.memory_space<vmem>>, %arg4: memref<1x96xf32, #tpu.memory_space<vmem>>, %arg5: memref<1x64xf32, #tpu.memory_space<vmem>>, %arg6: memref<1x16xf32, #tpu.memory_space<vmem>>, %arg7: memref<2x128xf32, #tpu.memory_space<vmem>>, %arg8: memref<2x16xf32, #tpu.memory_space<vmem>>) attributes {dimension_semantics = [#tpu.dimension_semantics<parallel>], iteration_bounds = array<i64: 1>, scalar_prefetch = 0 : i64, scratch_operands = 0 : i64, tpu.core_type = #tpu.core_type<tc>, window_params = [{pipeline_mode = #tpu.pipeline_mode<synchronous>, transform_indices = @transform_0, window_bounds = array<i64: 128, 96>}, {pipeline_mode = #tpu.pipeline_mode<synchronous>, transform_indices = @transform_1, window_bounds = array<i64: 96, 64>}, {pipeline_mode = #tpu.pipeline_mode<synchronous>, transform_indices = @transform_2, window_bounds = array<i64: 64, 16>}, {pipeline_mode = #tpu.pipeline_mode<synchronous>, transform_indices = @transform_3, window_bounds = array<i64: 1, 96>}, {pipeline_mode = #tpu.pipeline_mode<synchronous>, transform_indices = @transform_4, window_bounds = array<i64: 1, 64>}, {pipeline_mode = #tpu.pipeline_mode<synchronous>, transform_indices = @transform_5, window_bounds = array<i64: 1, 16>}, {transform_indices = @transform_6, window_bounds = array<i64: 2, 128>}, {transform_indices = @transform_7, window_bounds = array<i64: 2, 16>}]} {
    %c0 = arith.constant 0 : index
    %c0_0 = arith.constant 0 : index
    %0 = vector.load %arg7[%c0, %c0_0] : memref<2x128xf32, #tpu.memory_space<vmem>>, vector<2x128xf32>
    %c0_1 = arith.constant 0 : index
    %c0_2 = arith.constant 0 : index
    %1 = vector.load %arg1[%c0_1, %c0_2] : memref<128x96xf32, #tpu.memory_space<vmem>>, vector<128x96xf32>
    %cst = arith.constant dense<0.000000e+00> : vector<2x96xf32>
    %2 = tpu.matmul %0, %1, %cst {dimension_numbers = #tpu.dot_dimension_numbers<[1], [0], [0], [1], [0, 0, 1, 1], [], []>} : vector<2x128xf32>, vector<128x96xf32>, vector<2x96xf32> -> vector<2x96xf32>
    %c0_3 = arith.constant 0 : index
    %c0_4 = arith.constant 0 : index
    %3 = vector.load %arg4[%c0_3, %c0_4] : memref<1x96xf32, #tpu.memory_space<vmem>>, vector<1x96xf32>
    %4 = vector.broadcast %3 : vector<1x96xf32> to vector<2x96xf32>
    %5 = arith.addf %2, %4 : vector<2x96xf32>
    %cst_5 = arith.constant 5.000000e-01 : f32
    %6 = vector.broadcast %cst_5 : f32 to vector<2x96xf32>
    %7 = arith.mulf %6, %5 : vector<2x96xf32>
    %8 = math.tanh %7 : vector<2x96xf32>
    %cst_6 = arith.constant 5.000000e-01 : f32
    %9 = vector.broadcast %cst_6 : f32 to vector<2x96xf32>
    %10 = arith.mulf %9, %8 : vector<2x96xf32>
    %cst_7 = arith.constant 5.000000e-01 : f32
    %11 = vector.broadcast %cst_7 : f32 to vector<2x96xf32>
    %12 = arith.addf %10, %11 : vector<2x96xf32>
    %c0_8 = arith.constant 0 : index
    %c0_9 = arith.constant 0 : index
    %13 = vector.load %arg2[%c0_8, %c0_9] : memref<96x64xf32, #tpu.memory_space<vmem>>, vector<96x64xf32>
    %cst_10 = arith.constant dense<0.000000e+00> : vector<2x64xf32>
    %14 = tpu.matmul %12, %13, %cst_10 {dimension_numbers = #tpu.dot_dimension_numbers<[1], [0], [0], [1], [0, 0, 1, 1], [], []>} : vector<2x96xf32>, vector<96x64xf32>, vector<2x64xf32> -> vector<2x64xf32>
    %c0_11 = arith.constant 0 : index
    %c0_12 = arith.constant 0 : index
    %15 = vector.load %arg5[%c0_11, %c0_12] : memref<1x64xf32, #tpu.memory_space<vmem>>, vector<1x64xf32>
    %16 = vector.broadcast %15 : vector<1x64xf32> to vector<2x64xf32>
    %17 = arith.addf %14, %16 : vector<2x64xf32>
    %cst_13 = arith.constant 5.000000e-01 : f32
    %18 = vector.broadcast %cst_13 : f32 to vector<2x64xf32>
    %19 = arith.mulf %18, %17 : vector<2x64xf32>
    %20 = math.tanh %19 : vector<2x64xf32>
    %cst_14 = arith.constant 5.000000e-01 : f32
    %21 = vector.broadcast %cst_14 : f32 to vector<2x64xf32>
    %22 = arith.mulf %21, %20 : vector<2x64xf32>
    %cst_15 = arith.constant 5.000000e-01 : f32
    %23 = vector.broadcast %cst_15 : f32 to vector<2x64xf32>
    %24 = arith.addf %22, %23 : vector<2x64xf32>
    %c0_16 = arith.constant 0 : index
    %c0_17 = arith.constant 0 : index
    %25 = vector.load %arg3[%c0_16, %c0_17] : memref<64x16xf32, #tpu.memory_space<vmem>>, vector<64x16xf32>
    %cst_18 = arith.constant dense<0.000000e+00> : vector<2x16xf32>
    %26 = tpu.matmul %24, %25, %cst_18 {dimension_numbers = #tpu.dot_dimension_numbers<[1], [0], [0], [1], [0, 0, 1, 1], [], []>} : vector<2x64xf32>, vector<64x16xf32>, vector<2x16xf32> -> vector<2x16xf32>
    %c0_19 = arith.constant 0 : index
    %c0_20 = arith.constant 0 : index
    %27 = vector.load %arg6[%c0_19, %c0_20] : memref<1x16xf32, #tpu.memory_space<vmem>>, vector<1x16xf32>
    %28 = vector.broadcast %27 : vector<1x16xf32> to vector<2x16xf32>
    %29 = arith.addf %26, %28 : vector<2x16xf32>
    %cst_21 = arith.constant 5.000000e-01 : f32
    %30 = vector.broadcast %cst_21 : f32 to vector<2x16xf32>
    %31 = arith.mulf %30, %29 : vector<2x16xf32>
    %32 = math.tanh %31 : vector<2x16xf32>
    %cst_22 = arith.constant 5.000000e-01 : f32
    %33 = vector.broadcast %cst_22 : f32 to vector<2x16xf32>
    %34 = arith.mulf %33, %32 : vector<2x16xf32>
    %cst_23 = arith.constant 5.000000e-01 : f32
    %35 = vector.broadcast %cst_23 : f32 to vector<2x16xf32>
    %36 = arith.addf %34, %35 : vector<2x16xf32>
    %c0_24 = arith.constant 0 : index
    %c0_25 = arith.constant 0 : index
    %37 = vector.load %arg8[%c0_24, %c0_25] : memref<2x16xf32, #tpu.memory_space<vmem>>, vector<2x16xf32>
    tpu.vector_store %arg8[%c0_24, %c0_25], %36 {strides = array<i32>} : memref<2x16xf32, #tpu.memory_space<vmem>>, vector<2x16xf32>,
    return
  }
  func.func @transform_0(%arg0: i32) -> (i32, i32) {
    %c0_i32 = arith.constant 0 : i32
    %c0_i32_0 = arith.constant 0 : i32
    %c0_i32_1 = arith.constant 0 : i32
    return %c0_i32, %c0_i32_0 : i32, i32
  }
  func.func @transform_1(%arg0: i32) -> (i32, i32) {
    %c0_i32 = arith.constant 0 : i32
    %c0_i32_0 = arith.constant 0 : i32
    %c0_i32_1 = arith.constant 0 : i32
    return %c0_i32, %c0_i32_0 : i32, i32
  }
  func.func @transform_2(%arg0: i32) -> (i32, i32) {
    %c0_i32 = arith.constant 0 : i32
    %c0_i32_0 = arith.constant 0 : i32
    %c0_i32_1 = arith.constant 0 : i32
    return %c0_i32, %c0_i32_0 : i32, i32
  }
  func.func @transform_3(%arg0: i32) -> (i32, i32) {
    %c0_i32 = arith.constant 0 : i32
    %c0_i32_0 = arith.constant 0 : i32
    %c0_i32_1 = arith.constant 0 : i32
    return %c0_i32, %c0_i32_0 : i32, i32
  }
  func.func @transform_4(%arg0: i32) -> (i32, i32) {
    %c0_i32 = arith.constant 0 : i32
    %c0_i32_0 = arith.constant 0 : i32
    %c0_i32_1 = arith.constant 0 : i32
    return %c0_i32, %c0_i32_0 : i32, i32
  }
  func.func @transform_5(%arg0: i32) -> (i32, i32) {
    %c0_i32 = arith.constant 0 : i32
    %c0_i32_0 = arith.constant 0 : i32
    %c0_i32_1 = arith.constant 0 : i32
    return %c0_i32, %c0_i32_0 : i32, i32
  }
  func.func @transform_6(%arg0: i32) -> (i32, i32) {
    %c0_i32 = arith.constant 0 : i32
    %c0_i32_0 = arith.constant 0 : i32
    return %arg0, %c0_i32 : i32, i32
  }
  func.func @transform_7(%arg0: i32) -> (i32, i32) {
    %c0_i32 = arith.constant 0 : i32
    %c0_i32_0 = arith.constant 0 : i32
    return %arg0, %c0_i32 : i32, i32
  }
}

</mosaic_0001>

<llo_original>
// kernel: mlp_forward.1
$region0: #{mlp_forward.1}
  #allocation0 [shape = 'u32[]', space=smem, size = 0x4, offset = 0x4, fixed_abs, tag = 'smem constant byte address 0x4 - core index']
  #allocation1 [shape = 'u32[144,128]{1,0:T(1,128)}', space=vmem, size = 0x12000, scoped, tag = 'internal scratch']
  %s0 = inlined_call_operand.vmem [shape: f32[128,96], index: 0, kind: input, shape index: {}]
  %s1 = inlined_call_operand.vmem [shape: f32[96,64], index: 1, kind: input, shape index: {}]
  %s2 = inlined_call_operand.vmem [shape: f32[64,16], index: 2, kind: input, shape index: {}]
  %s3 = inlined_call_operand.vmem [shape: f32[1,96], index: 3, kind: input, shape index: {}]
  %s4 = inlined_call_operand.vmem [shape: f32[1,64], index: 4, kind: input, shape index: {}]
  %s5 = inlined_call_operand.vmem [shape: f32[1,16], index: 5, kind: input, shape index: {}]
  %s6 = inlined_call_operand.vmem [shape: f32[2,128], index: 6, kind: input, shape index: {}]
  %s7 = inlined_call_operand.vmem [shape: f32[2,16], index: 7, kind: output, shape index: {}]
  %s8 = sld [smem:[#allocation0]]
  $region38: #{mlp_forward.1} parent=0
    _
  %s10 = ssub.s32 1, %s8
  %s11 = scalar_select 0, %s10, %s8
  // Predicated region
  $region2: #{mlp_forward.1} parent=0 // pred_check
    _
  $region3: #{mlp_forward.1} parent=0 // pred_check_branch
    %13 = sbr.rel (0) target = $region5
  $region4: #{mlp_forward.1} parent=0 // pred_region
    _
  $region5: #{mlp_forward.1} parent=0 // pred_fallthru
    _
  // Predicated region
  $region6: #{mlp_forward.1} parent=0 // pred_check
    _
  $region7: #{mlp_forward.1} parent=0 // pred_check_branch
    %15 = sbr.rel (0) target = $region9
  $region8: #{mlp_forward.1} parent=0 // pred_region
    _
  $region9: #{mlp_forward.1} parent=0 // pred_fallthru
    _
  // Predicated region
  $region10: #{mlp_forward.1} parent=0 // pred_check
    _
  $region11: #{mlp_forward.1} parent=0 // pred_check_branch
    %17 = sbr.rel (0) target = $region13
  $region12: #{mlp_forward.1} parent=0 // pred_region
    _
  $region13: #{mlp_forward.1} parent=0 // pred_fallthru
    _
  // Predicated region
  $region14: #{mlp_forward.1} parent=0 // pred_check
    _
  $region15: #{mlp_forward.1} parent=0 // pred_check_branch
    %19 = sbr.rel (0) target = $region17
  $region16: #{mlp_forward.1} parent=0 // pred_region
    _
  $region17: #{mlp_forward.1} parent=0 // pred_fallthru
    _
  // Predicated region
  $region18: #{mlp_forward.1} parent=0 // pred_check
    _
  $region19: #{mlp_forward.1} parent=0 // pred_check_branch
    %21 = sbr.rel (0) target = $region21
  $region20: #{mlp_forward.1} parent=0 // pred_region
    _
  $region21: #{mlp_forward.1} parent=0 // pred_fallthru
    _
  // Predicated region
  $region22: #{mlp_forward.1} parent=0 // pred_check
    _
  $region23: #{mlp_forward.1} parent=0 // pred_check_branch
    %23 = sbr.rel (0) target = $region25
  $region24: #{mlp_forward.1} parent=0 // pred_region
    _
  $region25: #{mlp_forward.1} parent=0 // pred_fallthru
    _
  // Predicated region
  $region26: #{mlp_forward.1} parent=0 // pred_check
    _
  $region27: #{mlp_forward.1} parent=0 // pred_check_branch
    %25 = sbr.rel (0) target = $region29
  $region28: #{mlp_forward.1} parent=0 // pred_region
    _
  $region29: #{mlp_forward.1} parent=0 // pred_fallthru
    _
  %v26 = vld [vmem:[%s6] sm:$0x3]
  %v27 = vld [vmem:[%s0] sm:$0xff]
  %v28 = vld [vmem:[%s0 + $0x8] sm:$0xff]
  %v29 = vld [vmem:[%s0 + $0x10] sm:$0xff]
  %v30 = vld [vmem:[%s0 + $0x18] sm:$0xff]
  %v31 = vld [vmem:[%s0 + $0x20] sm:$0xff]
  %v32 = vld [vmem:[%s0 + $0x28] sm:$0xff]
  %v33 = vld [vmem:[%s0 + $0x30] sm:$0xff]
  %v34 = vld [vmem:[%s0 + $0x38] sm:$0xff]
  %v35 = vld [vmem:[%s0 + $0x40] sm:$0xff]
  %v36 = vld [vmem:[%s0 + $0x48] sm:$0xff]
  %v37 = vld [vmem:[%s0 + $0x50] sm:$0xff]
  %v38 = vld [vmem:[%s0 + $0x58] sm:$0xff]
  %v39 = vld [vmem:[%s0 + $0x60] sm:$0xff]
  %v40 = vld [vmem:[%s0 + $0x68] sm:$0xff]
  %v41 = vld [vmem:[%s0 + $0x70] sm:$0xff]
  %v42 = vld [vmem:[%s0 + $0x78] sm:$0xff]
  %v43 = vld [vmem:[%s3] sm:$0x1]
  %v45 = vlaneseq
  %v46 = vshrl.u32 %v45, 7
  %v47 = vsub.s32 0, %v46
  %v48 = vrot.slane %v43, %v47
  %50 = vmatprep.subr.mxu0 0.0
  %51 = vmatpush1.msra.mxu0 %v27
  %52 = vmatprep.subr.mxu0 0.0
  %53 = vmatpush1.msra.mxu0 %v28
  %54 = vmatprep.subr.mxu0 0.0
  %55 = vmatpush1.msra.mxu0 %v29
  %56 = vmatprep.subr.mxu0 0.0
  %57 = vmatpush1.msra.mxu0 %v30
  %58 = vmatprep.subr.mxu0 0.0
  %59 = vmatpush1.msra.mxu0 %v31
  %60 = vmatprep.subr.mxu0 0.0
  %61 = vmatpush1.msra.mxu0 %v32
  %62 = vmatprep.subr.mxu0 0.0
  %63 = vmatpush1.msra.mxu0 %v33
  %64 = vmatprep.subr.mxu0 0.0
  %65 = vmatpush1.msra.mxu0 %v34
  %66 = vmatprep.subr.mxu0 0.0
  %67 = vmatpush1.msra.mxu0 %v35
  %68 = vmatprep.subr.mxu0 0.0
  %69 = vmatpush1.msra.mxu0 %v36
  %70 = vmatprep.subr.mxu0 0.0
  %71 = vmatpush1.msra.mxu0 %v37
  %72 = vmatprep.subr.mxu0 0.0
  %73 = vmatpush1.msra.mxu0 %v38
  %74 = vmatprep.subr.mxu0 0.0
  %75 = vmatpush1.msra.mxu0 %v39
  %76 = vmatprep.subr.mxu0 0.0
  %77 = vmatpush1.msra.mxu0 %v40
  %78 = vmatprep.subr.mxu0 0.0
  %79 = vmatpush1.msra.mxu0 %v41
  %80 = vmatprep.subr.mxu0 0.0
  %81 = vmatpush1.msra.mxu0 %v42
  %82 = vmatprep.subr.mxu0 0.0
  %83 = vmatpush1.msra.mxu0 0.0
  %84 = vmatprep.subr.mxu0 0.0
  %85 = vmatpush1.msra.mxu0 0.0
  %86 = vmatprep.subr.mxu0 0.0
  %87 = vmatpush1.msra.mxu0 0.0
  %88 = vmatprep.subr.mxu0 0.0
  %89 = vmatpush1.msra.mxu0 0.0
  %90 = vmatprep.subr.mxu0 0.0
  %91 = vmatpush1.msra.mxu0 0.0
  %92 = vmatprep.subr.mxu0 0.0
  %93 = vmatpush1.msra.mxu0 0.0
  %94 = vmatprep.subr.mxu0 0.0
  %95 = vmatpush1.msra.mxu0 0.0
  %96 = vmatprep.subr.mxu0 0.0
  %97 = vmatpush1.msra.mxu0 0.0
  %98 = vmatprep.subr.mxu0 0.0
  %99 = vmatpush1.msra.mxu0 0.0
  %100 = vmatprep.subr.mxu0 0.0
  %101 = vmatpush1.msra.mxu0 0.0
  %102 = vmatprep.subr.mxu0 0.0
  %103 = vmatpush1.msra.mxu0 0.0
  %104 = vmatprep.subr.mxu0 0.0
  %105 = vmatpush1.msra.mxu0 0.0
  %106 = vmatprep.subr.mxu0 0.0
  %107 = vmatpush1.msra.mxu0 0.0
  %108 = vmatprep.subr.mxu0 0.0
  %109 = vmatpush1.msra.mxu0 0.0
  %110 = vmatprep.subr.mxu0 0.0
  %111 = vmatpush1.msra.mxu0 0.0
  %112 = vmatprep.subr.mxu0 0.0
  %113 = vmatpush1.msra.mxu0 0.0
  %114 = vmatprep.mubr.f32.mxu0 0.0
  %115 = vmatmul.mubr.f32.gmra.mrb[0].mxu0 %v26
  %v116 = vpop.f32.mrb[0].mxu0
  %v117 = vadd.f32 %v48, %v116
  %v118 = vpop.f32.mrb[0].mxu0
  %119 = vdwg.mxu0
  %v120 = vmul.f32 %v117, 0.5
  %v121 = vtanh.pop %v120
  %v122 = vmul.f32 %v121, 0.5
  %v123 = vadd.f32 %v122, 0.5
  %v124 = vld [vmem:[%s1] sm:$0xff]
  %v125 = vld [vmem:[%s1 + $0x8] sm:$0xff]
  %v126 = vld [vmem:[%s1 + $0x10] sm:$0xff]
  %v127 = vld [vmem:[%s1 + $0x18] sm:$0xff]
  %v128 = vld [vmem:[%s1 + $0x20] sm:$0xff]
  %v129 = vld [vmem:[%s1 + $0x28] sm:$0xff]
  %v130 = vld [vmem:[%s1 + $0x30] sm:$0xff]
  %v131 = vld [vmem:[%s1 + $0x38] sm:$0xff]
  %v132 = vld [vmem:[%s1 + $0x40] sm:$0xff]
  %v133 = vld [vmem:[%s1 + $0x48] sm:$0xff]
  %v134 = vld [vmem:[%s1 + $0x50] sm:$0xff]
  %v135 = vld [vmem:[%s1 + $0x58] sm:$0xff]
  %v136 = vld [vmem:[%s4] sm:$0x1]
  %v138 = vlaneseq
  %v139 = vshrl.u32 %v138, 7
  %v140 = vsub.s32 0, %v139
  %v141 = vrot.slane %v136, %v140
  %vm143 = vcmask 785408
  %v145 = vsel %vm143, %v123, 0
  %147 = vmatprep.subr.mxu0 0.0
  %148 = vmatpush1.msra.mxu0 %v124
  %149 = vmatprep.subr.mxu0 0.0
  %150 = vmatpush1.msra.mxu0 %v125
  %151 = vmatprep.subr.mxu0 0.0
  %152 = vmatpush1.msra.mxu0 %v126
  %153 = vmatprep.subr.mxu0 0.0
  %154 = vmatpush1.msra.mxu0 %v127
  %155 = vmatprep.subr.mxu0 0.0
  %156 = vmatpush1.msra.mxu0 %v128
  %157 = vmatprep.subr.mxu0 0.0
  %158 = vmatpush1.msra.mxu0 %v129
  %159 = vmatprep.subr.mxu0 0.0
  %160 = vmatpush1.msra.mxu0 %v130
  %161 = vmatprep.subr.mxu0 0.0
  %162 = vmatpush1.msra.mxu0 %v131
  %163 = vmatprep.subr.mxu0 0.0
  %164 = vmatpush1.msra.mxu0 %v132
  %165 = vmatprep.subr.mxu0 0.0
  %166 = vmatpush1.msra.mxu0 %v133
  %167 = vmatprep.subr.mxu0 0.0
  %168 = vmatpush1.msra.mxu0 %v134
  %169 = vmatprep.subr.mxu0 0.0
  %170 = vmatpush1.msra.mxu0 %v135
  %171 = vmatprep.subr.mxu0 0.0
  %172 = vmatpush1.msra.mxu0 0.0
  %173 = vmatprep.subr.mxu0 0.0
  %174 = vmatpush1.msra.mxu0 0.0
  %175 = vmatprep.subr.mxu0 0.0
  %176 = vmatpush1.msra.mxu0 0.0
  %177 = vmatprep.subr.mxu0 0.0
  %178 = vmatpush1.msra.mxu0 0.0
  %179 = vmatprep.subr.mxu0 0.0
  %180 = vmatpush1.msra.mxu0 0.0
  %181 = vmatprep.subr.mxu0 0.0
  %182 = vmatpush1.msra.mxu0 0.0
  %183 = vmatprep.subr.mxu0 0.0
  %184 = vmatpush1.msra.mxu0 0.0
  %185 = vmatprep.subr.mxu0 0.0
  %186 = vmatpush1.msra.mxu0 0.0
  %187 = vmatprep.subr.mxu0 0.0
  %188 = vmatpush1.msra.mxu0 0.0
  %189 = vmatprep.subr.mxu0 0.0
  %190 = vmatpush1.msra.mxu0 0.0
  %191 = vmatprep.subr.mxu0 0.0
  %192 = vmatpush1.msra.mxu0 0.0
  %193 = vmatprep.subr.mxu0 0.0
  %194 = vmatpush1.msra.mxu0 0.0
  %195 = vmatprep.subr.mxu0 0.0
  %196 = vmatpush1.msra.mxu0 0.0
  %197 = vmatprep.subr.mxu0 0.0
  %198 = vmatpush1.msra.mxu0 0.0
  %199 = vmatprep.subr.mxu0 0.0
  %200 = vmatpush1.msra.mxu0 0.0
  %201 = vmatprep.subr.mxu0 0.0
  %202 = vmatpush1.msra.mxu0 0.0
  %203 = vmatprep.subr.mxu0 0.0
  %204 = vmatpush1.msra.mxu0 0.0
  %205 = vmatprep.subr.mxu0 0.0
  %206 = vmatpush1.msra.mxu0 0.0
  %207 = vmatprep.subr.mxu0 0.0
  %208 = vmatpush1.msra.mxu0 0.0
  %209 = vmatprep.subr.mxu0 0.0
  %210 = vmatpush1.msra.mxu0 0.0
  %211 = vmatprep.mubr.f32.mxu0 0.0
  %212 = vmatmul.mubr.f32.gmra.mrb[0].mxu0 %v145
  %v213 = vpop.f32.mrb[0].mxu0
  %v214 = vadd.f32 %v141, %v213
  %v215 = vpop.f32.mrb[0].mxu0
  %216 = vdwg.mxu0
  %v217 = vmul.f32 %v214, 0.5
  %v218 = vtanh.pop %v217
  %v219 = vmul.f32 %v218, 0.5
  %v220 = vadd.f32 %v219, 0.5
  %v221 = vld [vmem:[%s2] sm:$0xff]
  %v222 = vld [vmem:[%s2 + $0x8] sm:$0xff]
  %v223 = vld [vmem:[%s2 + $0x10] sm:$0xff]
  %v224 = vld [vmem:[%s2 + $0x18] sm:$0xff]
  %v225 = vld [vmem:[%s2 + $0x20] sm:$0xff]
  %v226 = vld [vmem:[%s2 + $0x28] sm:$0xff]
  %v227 = vld [vmem:[%s2 + $0x30] sm:$0xff]
  %v228 = vld [vmem:[%s2 + $0x38] sm:$0xff]
  %v229 = vld [vmem:[%s5] sm:$0x1]
  %v231 = vlaneseq
  %v232 = vshrl.u32 %v231, 7
  %v233 = vsub.s32 0, %v232
  %v234 = vrot.slane %v229, %v233
  %vm236 = vcmask 523264
  %v238 = vsel %vm236, %v220, 0
  %240 = vmatprep.subr.mxu0 0.0
  %241 = vmatpush1.msra.mxu0 %v221
  %242 = vmatprep.subr.mxu0 0.0
  %243 = vmatpush1.msra.mxu0 %v222
  %244 = vmatprep.subr.mxu0 0.0
  %245 = vmatpush1.msra.mxu0 %v223
  %246 = vmatprep.subr.mxu0 0.0
  %247 = vmatpush1.msra.mxu0 %v224
  %248 = vmatprep.subr.mxu0 0.0
  %249 = vmatpush1.msra.mxu0 %v225
  %250 = vmatprep.subr.mxu0 0.0
  %251 = vmatpush1.msra.mxu0 %v226
  %252 = vmatprep.subr.mxu0 0.0
  %253 = vmatpush1.msra.mxu0 %v227
  %254 = vmatprep.subr.mxu0 0.0
  %255 = vmatpush1.msra.mxu0 %v228
  %256 = vmatprep.subr.mxu0 0.0
  %257 = vmatpush1.msra.mxu0 0.0
  %258 = vmatprep.subr.mxu0 0.0
  %259 = vmatpush1.msra.mxu0 0.0
  %260 = vmatprep.subr.mxu0 0.0
  %261 = vmatpush1.msra.mxu0 0.0
  %262 = vmatprep.subr.mxu0 0.0
  %263 = vmatpush1.msra.mxu0 0.0
  %264 = vmatprep.subr.mxu0 0.0
  %265 = vmatpush1.msra.mxu0 0.0
  %266 = vmatprep.subr.mxu0 0.0
  %267 = vmatpush1.msra.mxu0 0.0
  %268 = vmatprep.subr.mxu0 0.0
  %269 = vmatpush1.msra.mxu0 0.0
  %270 = vmatprep.subr.mxu0 0.0
  %271 = vmatpush1.msra.mxu0 0.0
  %272 = vmatprep.subr.mxu0 0.0
  %273 = vmatpush1.msra.mxu0 0.0
  %274 = vmatprep.subr.mxu0 0.0
  %275 = vmatpush1.msra.mxu0 0.0
  %276 = vmatprep.subr.mxu0 0.0
  %277 = vmatpush1.msra.mxu0 0.0
  %278 = vmatprep.subr.mxu0 0.0
  %279 = vmatpush1.msra.mxu0 0.0
  %280 = vmatprep.subr.mxu0 0.0
  %281 = vmatpush1.msra.mxu0 0.0
  %282 = vmatprep.subr.mxu0 0.0
  %283 = vmatpush1.msra.mxu0 0.0
  %284 = vmatprep.subr.mxu0 0.0
  %285 = vmatpush1.msra.mxu0 0.0
  %286 = vmatprep.subr.mxu0 0.0
  %287 = vmatpush1.msra.mxu0 0.0
  %288 = vmatprep.subr.mxu0 0.0
  %289 = vmatpush1.msra.mxu0 0.0
  %290 = vmatprep.subr.mxu0 0.0
  %291 = vmatpush1.msra.mxu0 0.0
  %292 = vmatprep.subr.mxu0 0.0
  %293 = vmatpush1.msra.mxu0 0.0
  %294 = vmatprep.subr.mxu0 0.0
  %295 = vmatpush1.msra.mxu0 0.0
  %296 = vmatprep.subr.mxu0 0.0
  %297 = vmatpush1.msra.mxu0 0.0
  %298 = vmatprep.subr.mxu0 0.0
  %299 = vmatpush1.msra.mxu0 0.0
  %300 = vmatprep.subr.mxu0 0.0
  %301 = vmatpush1.msra.mxu0 0.0
  %302 = vmatprep.subr.mxu0 0.0
  %303 = vmatpush1.msra.mxu0 0.0
  %304 = vmatprep.mubr.f32.mxu0 0.0
  %305 = vmatmul.mubr.f32.gmra.mrb[0].mxu0 %v238
  %v306 = vpop.f32.mrb[0].mxu0
  %v307 = vadd.f32 %v234, %v306
  %v308 = vpop.f32.mrb[0].mxu0
  %309 = vdwg.mxu0
  %v310 = vmul.f32 %v307, 0.5
  %v311 = vtanh.pop %v310
  %v312 = vmul.f32 %v311, 0.5
  %v313 = vadd.f32 %v312, 0.5
  %vm314 = vcmask 123904
  %315 = vst.msk [vmem:[%s7] sm:$0x3] %vm314, %v313
  // Predicated region
  $region30: #{mlp_forward.1} parent=0 // pred_check
    _
  $region31: #{mlp_forward.1} parent=0 // pred_check_branch
    %317 = sbr.rel (0) target = $region33
  $region32: #{mlp_forward.1} parent=0 // pred_region
    _
  $region33: #{mlp_forward.1} parent=0 // pred_fallthru
    _
  // Predicated region
  $region34: #{mlp_forward.1} parent=0 // pred_check
    _
  $region35: #{mlp_forward.1} parent=0 // pred_check_branch
    %319 = sbr.rel (0) target = $region37
  $region36: #{mlp_forward.1} parent=0 // pred_region
    _
  $region37: #{mlp_forward.1} parent=0 // pred_fallthru
    _

</llo_original>
